<compile_context>
chip_gen: v7x
topology: tpu7x:2x2x1
jax: 0.10.0
libtpu: 0.0.40
codegen_flags: <defaults>
</compile_context>

<pallas_src>
import jax
import jax.numpy as jnp
from jax.experimental import pallas as pl
from jax.experimental.pallas import tpu as pltpu


def _make_dma_identity_kernel(chunks):
    """Build a kernel copying x_ref -> o_ref via len(chunks) overlapped DMAs.

    `chunks` is a static tuple of (start, size) ranges along dim 0; issuing a
    few DMAs (instead of one giant one) lets the DMA engines overlap on large
    tensors while staying a single kernel invocation (no grid, no VMEM).
    """

    def kernel(x_ref, o_ref, sem):
        copies = []
        for i, (start, size) in enumerate(chunks):
            if start == 0 and size == x_ref.shape[0]:
                src, dst = x_ref, o_ref                      # whole-array copy
            else:
                src = x_ref.at[pl.ds(start, size)]           # static row range
                dst = o_ref.at[pl.ds(start, size)]
            cp = pltpu.make_async_copy(src, dst, sem.at[i])
            cp.start()
            copies.append(cp)
        for cp in copies:
            cp.wait()

    return kernel


def print_layer(x: jax.Array) -> jax.Array:
    """Identity forward pass (PyTorch PrintLayer) as a Pallas HBM->HBM DMA copy."""
    # TODO(synk): if the caller can donate x, `return x` is strictly faster
    # (zero HBM traffic); the kernel below is kept as the debug-hook point.
    if x.size == 0:
        return x

    orig_shape = x.shape
    xv = x if x.ndim >= 1 else x.reshape(1)  # rank-0: free reshape to (1,)

    itemsize = jnp.dtype(xv.dtype).itemsize
    total_bytes = xv.size * itemsize
    dim0 = xv.shape[0]

    # Up to 8 DMAs of >= ~1 MiB each, limited by the leading-dim extent.
    k = int(min(8, dim0, max(1, total_bytes // (1 << 20))))
    base, rem = divmod(dim0, k)
    chunks, start = [], 0
    for i in range(k):
        size = base + (1 if i < rem else 0)
        chunks.append((start, size))
        start += size
    chunks = tuple(chunks)

    out = pl.pallas_call(
        _make_dma_identity_kernel(chunks),
        out_shape=jax.ShapeDtypeStruct(xv.shape, xv.dtype),
        in_specs=[pl.BlockSpec(memory_space=pl.ANY)],    # raw HBM ref, no auto-DMA
        out_specs=pl.BlockSpec(memory_space=pl.ANY),     # raw HBM ref, written by DMA
        scratch_shapes=[pltpu.SemaphoreType.DMA((len(chunks),))],
        cost_estimate=pl.CostEstimate(
            flops=0, transcendentals=0, bytes_accessed=2 * total_bytes
        ),
    )(xv)

    return out.reshape(orig_shape)


if __name__ == "__main__":
    key = jax.random.PRNGKey(0)

    # Primary example consistent with the module (NCHW activations).
    x = jax.random.normal(key, (2, 4, 16, 16), dtype=jnp.float32)
    y = print_layer(x)
    jax.block_until_ready(y)
    assert y.shape == x.shape and y.dtype == x.dtype
    assert bool(jnp.all(y == x))

    # Ragged / sub-32-bit case (the old kernel's weak spot): odd dims, bf16.
    x2 = jax.random.normal(jax.random.PRNGKey(1), (2, 3, 5, 7), dtype=jnp.bfloat16)
    y2 = print_layer(x2)
    jax.block_until_ready(y2)
    assert y2.shape == x2.shape and y2.dtype == x2.dtype
    assert bool(jnp.all(y2 == x2))

    print("KERNEL_OK")
</pallas_src>

<mosaic_0001>
module attributes {stable_mosaic.version = 11 : i64} {
  func.func @kernel(%arg0: memref<2x4x16x16xf32, #tpu.memory_space<any>>, %arg1: memref<2x4x16x16xf32, #tpu.memory_space<any>>, %arg2: memref<1x!tpu.dma_semaphore, #tpu.memory_space<semaphore_mem>>) attributes {dimension_semantics = [], scalar_prefetch = 0 : i64, scratch_operands = 1 : i64, tpu.core_type = #tpu.core_type<tc>} {
    %c0_i32 = arith.constant 0 : i32
    %0 = tpu.memref_slice %arg2[%c0_i32] : memref<1x!tpu.dma_semaphore, #tpu.memory_space<semaphore_mem>> -> memref<1x!tpu.dma_semaphore, #tpu.memory_space<semaphore_mem>>
    %1 = tpu.memref_squeeze %0 : memref<1x!tpu.dma_semaphore, #tpu.memory_space<semaphore_mem>> -> memref<!tpu.dma_semaphore, #tpu.memory_space<semaphore_mem>>
    tpu.enqueue_dma source(%arg0 : memref<2x4x16x16xf32, #tpu.memory_space<any>>) target(%arg1 : memref<2x4x16x16xf32, #tpu.memory_space<any>>) target_semaphore(%1 : memref<!tpu.dma_semaphore, #tpu.memory_space<semaphore_mem>>)
    %c0_i32_0 = arith.constant 0 : i32
    %2 = tpu.memref_slice %arg2[%c0_i32_0] : memref<1x!tpu.dma_semaphore, #tpu.memory_space<semaphore_mem>> -> memref<1x!tpu.dma_semaphore, #tpu.memory_space<semaphore_mem>>
    %3 = tpu.memref_squeeze %2 : memref<1x!tpu.dma_semaphore, #tpu.memory_space<semaphore_mem>> -> memref<!tpu.dma_semaphore, #tpu.memory_space<semaphore_mem>>
    tpu.wait_dma2 semaphore(%3 : memref<!tpu.dma_semaphore, #tpu.memory_space<semaphore_mem>>) src(%arg0 : memref<2x4x16x16xf32, #tpu.memory_space<any>>) dst(%arg1 : memref<2x4x16x16xf32, #tpu.memory_space<any>>)
    return
  }
}

</mosaic_0001>

<llo_original>
// kernel: tpu_custom_call.1
$region0: #{tpu_custom_call.1}
  #allocation0 [shape = 'u32[]', space=smem, size = 0x4, offset = 0x4, fixed_abs, tag = 'smem constant byte address 0x4 - core index']
  #allocation1 [shape = 'u32[144,128]{1,0:T(1,128)}', space=vmem, size = 0x12000, scoped, tag = 'internal scratch']
  #allocation2 [shape = 's32[1]{0}', space=sflag, size = 0x4, scoped, tag = 'scratch operand']
  #allocation3 [shape = 's32[]', space=sflag, size = 0x4, offset = 0, fixed_abs, tag = 'sflag constant byte address 0x0 - dummy sync flag']
  #allocation4 [shape = 'u32[0]{0}', space=smem, size = 0, offset = 0, fixed_abs, tag = 'smem constant byte address 0x0 - null']
  %s0 = inlined_call_operand.hbm [shape: f32[2,4,16,16], index: 0, kind: input, shape index: {}]
  %s1 = inlined_call_operand.hbm [shape: f32[2,4,16,16], index: 1, kind: output, shape index: {}]
  %s2 = sld [smem:[#allocation0]]
  $region2: #{tpu_custom_call.1} parent=0
    _
  %s4 = ssub.s32 1, %s2
  %s5 = scalar_select 0, %s4, %s2
  %s7 = sshll.u32 1, 14
  %s8 = sxor.u32 4294967295, %s7
  %s11 = sshll.u32 3, 24
  %s12 = sxor.u32 4294967295, %s11
  %s13 = sand.u32 0, %s12
  %s15 = sor.u32 %s13, 0
  %18 = dma.general %s0, 2048, %s1, [#allocation2], [#allocation3], [#allocation4], %s15, 0
  %s19 = smul.u32 2, 4
  %s20 = smul.u32 %s19, 16
  %s21 = smul.u32 %s20, 1
  %s22 = sshll.u32 %s21, 4
  %23 = dma.done [#allocation2], %s22
  %24 = vsyncmov [#allocation2]
  %s25 = vpop.sfrf %24
  %p26 = scmp.eq.s32.totalorder %s25, 0
  %p27 = pneg %p26
  %29 = shalt.err (%p27)

</llo_original>
